<compile_context>
chip_gen: v7x
topology: tpu7x:2x2x1
jax: 0.10.0
libtpu: 0.0.40
codegen_flags: <defaults>
</compile_context>

<pallas_src>
import jax
import jax.numpy as jnp
from jax import lax
from jax.experimental import pallas as pl
from jax.experimental.pallas import tpu as pltpu

TAU = 1.0 / 30.0
INV_TAU = 1.0 / TAU
EPS = 1e-12  # matches F.normalize(p=2, dim=-1) eps


def _lprop_attn_kernel(q_ref, k_ref, v_ref, o_ref, acc_sc):
    """Masked cross-frame attention with fused softmax numerator/denominator.

    grid = (F, n_qtiles, F-1, n_ktiles); the key-frame index_map skips the
    query frame, so every grid step does useful work.
      q_ref:  (1, tq, C)   query tokens, L2-normalized (resident across keys)
      k_ref:  (1, tk, C)   key tokens, L2-normalized
      v_ref:  (1, 2, tk)   row 0 = mask values, row 1 = valid indicator
      o_ref:  (1, 8, tq)   lane-dense output (8 replicated sublane rows)
      acc_sc: (2, tq)      running [numerator; denominator] (lane-dense)
    """
    kj = pl.program_id(2)
    kt = pl.program_id(3)

    @pl.when((kj == 0) & (kt == 0))
    def _init():
        acc_sc[...] = jnp.zeros_like(acc_sc)

    q = q_ref[0]                                   # (tq, C) f32
    k = k_ref[0]                                   # (tk, C) f32
    # transposed scores: s_T[key, query] = <k, q>, contracted over C
    s_t = lax.dot_general(k, q, dimension_numbers=(((1,), (1,)), ((), ())),
                          preferred_element_type=jnp.float32)   # (tk, tq)
    # cosine bound cos <= 1: constant shift gives an exact softmax numerator;
    # the 1/tau scale is folded here (one VPU mul, co-issues under MXU work).
    p = jnp.exp(s_t * INV_TAU - INV_TAU)
    # fused numerator + denominator: (2, tk) @ (tk, tq) streams only 2 MXU rows
    acc_sc[...] += jnp.dot(v_ref[0], p, preferred_element_type=jnp.float32)

    @pl.when((kj == pl.num_programs(2) - 1) & (kt == pl.num_programs(3) - 1))
    def _finalize():
        num = acc_sc[0:1, :]                       # (1, tq)
        den = acc_sc[1:2, :]                       # (1, tq)
        res = num * pl.reciprocal(den, approx=False)
        # lane-dense, sublane-replicated store (row 0 used by the wrapper)
        o_ref[...] = jnp.broadcast_to(res[None], o_ref.shape).astype(o_ref.dtype)


def _pick_tile(hw_padded, max_tile):
    """Largest multiple of 128 that divides hw_padded and is <= max_tile."""
    assert hw_padded % 128 == 0 and max_tile >= 128
    m = hw_padded // 128
    best = 1
    for d in range(1, m + 1):
        if m % d == 0 and 128 * d <= max_tile:
            best = d
    return 128 * best


def _vmem_limit_bytes():
    cap = None
    try:
        cap = getattr(pltpu.get_tpu_info(), "vmem_capacity_bytes", None)
    except Exception:
        cap = None
    if not isinstance(cap, int) or cap <= 0:
        cap = 64 * 1024 * 1024  # conservative (v7x physical VMEM)
    return max(32 * 1024 * 1024, min(cap // 2, 64 * 1024 * 1024))


def label_propagator_mode3(masks, feats, *, max_tile=512):
    """LabelPropagator(lprop_mode=3).forward(masks, feats).

    masks: (F, 1, H, W) float32
    feats: (F, C, H, W) float32
    returns: (1, 1, F, H, W) float32   (num_sequences=1, ce=1)
    """
    nf, s, h, w = masks.shape
    nf2, c, h2, w2 = feats.shape
    assert nf == nf2 and s == 1 and h == h2 and w == w2 and nf >= 2
    hw = h * w
    hw_p = ((hw + 127) // 128) * 128            # pad tokens to a lane multiple

    # Token layout (F, HW, C): spatial order y*W + x matches the PyTorch
    # reshape(F, S, C, -1).permute(0, 3, 1, 2).  Normalize ONCE here (reused
    # 2*(F-1) times inside the kernel); padded rows stay exactly zero.
    x = jnp.transpose(feats.reshape(nf, c, hw), (0, 2, 1)).astype(jnp.float32)
    if hw_p != hw:
        x = jnp.pad(x, ((0, 0), (0, hw_p - hw), (0, 0)))
    norm = jnp.maximum(jnp.sqrt(jnp.sum(x * x, axis=-1, keepdims=True)), EPS)
    tok = x / norm                               # (F, hw_p, C) unit-norm q & k

    # Augmented values, transposed to (F, 2, hw_p): row 0 = mask values,
    # row 1 = valid indicator.  Padded columns are 0 in BOTH rows, so padded
    # keys contribute exactly zero to numerator and denominator.
    mvals = masks.reshape(nf, hw).astype(jnp.float32)
    ones = jnp.ones((nf, hw), jnp.float32)
    if hw_p != hw:
        pad = ((0, 0), (0, hw_p - hw))
        mvals = jnp.pad(mvals, pad)
        ones = jnp.pad(ones, pad)
    v_aug = jnp.stack([mvals, ones], axis=1)     # (F, 2, hw_p)

    tq = _pick_tile(hw_p, max_tile)
    tk = tq
    n_qt = hw_p // tq
    n_kt = hw_p // tk

    # key index_map skips the query frame: kj in [0, F-1) -> frame kj + (kj>=qi)
    def _k_frame(qi, kj):
        return kj + jnp.where(kj >= qi, 1, 0)

    out = pl.pallas_call(
        _lprop_attn_kernel,
        out_shape=jax.ShapeDtypeStruct((nf, 8, hw_p), jnp.float32),
        grid_spec=pltpu.PrefetchScalarGridSpec(
            num_scalar_prefetch=0,
            grid=(nf, n_qt, nf - 1, n_kt),
            in_specs=[
                pl.BlockSpec((1, tq, c),
                             lambda qi, qt, kj, kt: (qi, qt, 0)),
                pl.BlockSpec((1, tk, c),
                             lambda qi, qt, kj, kt: (_k_frame(qi, kj), kt, 0)),
                pl.BlockSpec((1, 2, tk),
                             lambda qi, qt, kj, kt: (_k_frame(qi, kj), 0, kt)),
            ],
            out_specs=pl.BlockSpec((1, 8, tq),
                                   lambda qi, qt, kj, kt: (qi, 0, qt)),
            scratch_shapes=[pltpu.VMEM((2, tq), jnp.float32)],
        ),
        compiler_params=pltpu.CompilerParams(
            dimension_semantics=("parallel", "parallel", "arbitrary", "arbitrary"),
            vmem_limit_bytes=_vmem_limit_bytes(),
        ),
    )(tok, tok, v_aug)

    # take sublane row 0, drop token padding, reshape to (1, 1, F, H, W)
    return out[:, 0, :hw].reshape(nf, h, w)[None, None]


def _reference(masks, feats):
    """Pure-JAX replica of the PyTorch lprop_mode=3 forward (for verification)."""
    nf, _, h, w = masks.shape
    _, c, _, _ = feats.shape
    hw = h * w
    x = jnp.transpose(feats.reshape(nf, c, hw), (0, 2, 1)).reshape(nf * hw, c)
    xn = x / jnp.maximum(jnp.linalg.norm(x, axis=-1, keepdims=True), EPS)
    scores = xn @ xn.T
    frame_id = jnp.repeat(jnp.arange(nf), hw)
    mask = jnp.where(frame_id[:, None] == frame_id[None, :], -jnp.inf, 0.0)
    aff = jax.nn.softmax((scores + mask) / TAU, axis=-1)
    out = aff @ masks.reshape(nf * hw, 1)
    return out.reshape(nf, h, w)[None, None]


def _run_case(nf, c, h, w, max_tile, seed=0):
    key1, key2 = jax.random.split(jax.random.PRNGKey(seed))
    feats = jax.random.normal(key1, (nf, c, h, w), dtype=jnp.float32)
    masks = jax.random.uniform(key2, (nf, 1, h, w), dtype=jnp.float32)
    ref = _reference(masks, feats)
    fn = jax.jit(lambda m, f: label_propagator_mode3(m, f, max_tile=max_tile))
    out = jax.block_until_ready(fn(masks, feats))
    assert out.shape == (1, 1, nf, h, w), out.shape
    err = float(jnp.max(jnp.abs(out - ref)))
    assert err < 1e-4, (nf, c, h, w, max_tile, err)
    return err


if __name__ == "__main__":
    # num_frames=3, feat_dim=32, H=W=16 (num_sequences=1 in mode 3)
    # tiled path: hw=256 -> tq=tk=128, grid (3, 2, 2, 2)
    _run_case(3, 32, 16, 16, max_tile=128)
    # single-tile path: hw=256 <= 512 -> tq=tk=256, grid (3, 1, 2, 1)
    _run_case(3, 32, 16, 16, max_tile=512)
    # padded path: hw=100 -> padded to 128, padded keys contribute exactly zero
    _run_case(3, 32, 10, 10, max_tile=512)

    print("KERNEL_OK")
</pallas_src>

<mosaic_0001>
module attributes {stable_mosaic.version = 11 : i64} {
  func.func @_lprop_attn_kernel(%arg0: i32, %arg1: i32, %arg2: i32, %arg3: i32, %arg4: memref<1x128x32xf32, #tpu.memory_space<vmem>>, %arg5: memref<1x128x32xf32, #tpu.memory_space<vmem>>, %arg6: memref<1x2x128xf32, #tpu.memory_space<vmem>>, %arg7: memref<1x8x128xf32, #tpu.memory_space<vmem>>, %arg8: memref<2x128xf32, #tpu.memory_space<vmem>>) attributes {dimension_semantics = [#tpu.dimension_semantics<parallel>, #tpu.dimension_semantics<parallel>, #tpu.dimension_semantics<arbitrary>, #tpu.dimension_semantics<arbitrary>], iteration_bounds = array<i64: 3, 2, 2, 2>, scalar_prefetch = 0 : i64, scratch_operands = 1 : i64, tpu.core_type = #tpu.core_type<tc>, window_params = [{transform_indices = @transform_0, window_bounds = array<i64: 1, 128, 32>}, {transform_indices = @transform_1, window_bounds = array<i64: 1, 128, 32>}, {transform_indices = @transform_2, window_bounds = array<i64: 1, 2, 128>}, {transform_indices = @transform_3, window_bounds = array<i64: 1, 8, 128>}]} {
    %c0_i32 = arith.constant 0 : i32
    %0 = arith.cmpi eq, %arg2, %c0_i32 : i32
    %c0_i32_0 = arith.constant 0 : i32
    %1 = arith.cmpi eq, %arg3, %c0_i32_0 : i32
    %2 = arith.andi %0, %1 : i1
    %3 = arith.extui %2 : i1 to i32
    %c0_i32_1 = arith.constant 0 : i32
    %4 = arith.cmpi ne, %3, %c0_i32_1 : i32
    scf.if %4 {
      %cst_19 = arith.constant 0.000000e+00 : f32
      %26 = vector.broadcast %cst_19 : f32 to vector<2x128xf32>
      %c0_20 = arith.constant 0 : index
      %c0_21 = arith.constant 0 : index
      %27 = vector.load %arg8[%c0_20, %c0_21] : memref<2x128xf32, #tpu.memory_space<vmem>>, vector<2x128xf32>
      tpu.vector_store %arg8[%c0_20, %c0_21], %26 {strides = array<i32>} : memref<2x128xf32, #tpu.memory_space<vmem>>, vector<2x128xf32>,
    } else {
    }
    %c0 = arith.constant 0 : index
    %c0_2 = arith.constant 0 : index
    %c0_3 = arith.constant 0 : index
    %5 = vector.load %arg4[%c0, %c0_2, %c0_3] : memref<1x128x32xf32, #tpu.memory_space<vmem>>, vector<1x128x32xf32>
    %6 = vector.shape_cast %5 : vector<1x128x32xf32> to vector<128x32xf32>
    %c0_4 = arith.constant 0 : index
    %c0_5 = arith.constant 0 : index
    %c0_6 = arith.constant 0 : index
    %7 = vector.load %arg5[%c0_4, %c0_5, %c0_6] : memref<1x128x32xf32, #tpu.memory_space<vmem>>, vector<1x128x32xf32>
    %8 = vector.shape_cast %7 : vector<1x128x32xf32> to vector<128x32xf32>
    %cst = arith.constant dense<0.000000e+00> : vector<128x128xf32>
    %9 = tpu.matmul %8, %6, %cst {dimension_numbers = #tpu.dot_dimension_numbers<[1], [1], [0], [0], [0, 0, 1, 0], [], []>} : vector<128x32xf32>, vector<128x32xf32>, vector<128x128xf32> -> vector<128x128xf32>
    %cst_7 = arith.constant 3.000000e+01 : f32
    %10 = vector.broadcast %cst_7 : f32 to vector<128x128xf32>
    %11 = arith.mulf %9, %10 : vector<128x128xf32>
    %cst_8 = arith.constant 3.000000e+01 : f32
    %12 = vector.broadcast %cst_8 : f32 to vector<128x128xf32>
    %13 = arith.subf %11, %12 : vector<128x128xf32>
    %14 = math.exp %13 : vector<128x128xf32>
    %c0_9 = arith.constant 0 : index
    %c0_10 = arith.constant 0 : index
    %15 = vector.load %arg8[%c0_9, %c0_10] : memref<2x128xf32, #tpu.memory_space<vmem>>, vector<2x128xf32>
    %c0_11 = arith.constant 0 : index
    %c0_12 = arith.constant 0 : index
    %c0_13 = arith.constant 0 : index
    %16 = vector.load %arg6[%c0_11, %c0_12, %c0_13] : memref<1x2x128xf32, #tpu.memory_space<vmem>>, vector<1x2x128xf32>
    %17 = vector.shape_cast %16 : vector<1x2x128xf32> to vector<2x128xf32>
    %cst_14 = arith.constant dense<0.000000e+00> : vector<2x128xf32>
    %18 = tpu.matmul %17, %14, %cst_14 {dimension_numbers = #tpu.dot_dimension_numbers<[1], [0], [0], [1], [0, 0, 1, 1], [], []>} : vector<2x128xf32>, vector<128x128xf32>, vector<2x128xf32> -> vector<2x128xf32>
    %19 = arith.addf %15, %18 : vector<2x128xf32>
    %c0_15 = arith.constant 0 : index
    %c0_16 = arith.constant 0 : index
    %20 = vector.load %arg8[%c0_15, %c0_16] : memref<2x128xf32, #tpu.memory_space<vmem>>, vector<2x128xf32>
    tpu.vector_store %arg8[%c0_15, %c0_16], %19 {strides = array<i32>} : memref<2x128xf32, #tpu.memory_space<vmem>>, vector<2x128xf32>,
    %c1_i32 = arith.constant 1 : i32
    %21 = arith.cmpi eq, %arg2, %c1_i32 : i32
    %c1_i32_17 = arith.constant 1 : i32
    %22 = arith.cmpi eq, %arg3, %c1_i32_17 : i32
    %23 = arith.andi %21, %22 : i1
    %24 = arith.extui %23 : i1 to i32
    %c0_i32_18 = arith.constant 0 : i32
    %25 = arith.cmpi ne, %24, %c0_i32_18 : i32
    scf.if %25 {
      %c0_19 = arith.constant 0 : index
      %c0_20 = arith.constant 0 : index
      %26 = vector.load %arg8[%c0_19, %c0_20] : memref<2x128xf32, #tpu.memory_space<vmem>>, vector<1x128xf32>
      %c1 = arith.constant 1 : index
      %c0_21 = arith.constant 0 : index
      %27 = vector.load %arg8[%c1, %c0_21] : memref<2x128xf32, #tpu.memory_space<vmem>>, vector<1x128xf32>
      %28 = tpu.reciprocal %27 : vector<1x128xf32> -> vector<1x128xf32>
      %29 = arith.mulf %26, %28 : vector<1x128xf32>
      %30 = vector.shape_cast %29 : vector<1x128xf32> to vector<1x1x128xf32>
      %31 = vector.shape_cast %30 : vector<1x1x128xf32> to vector<1x1x128xf32>
      %32 = vector.broadcast %31 : vector<1x1x128xf32> to vector<1x8x128xf32>
      %c0_22 = arith.constant 0 : index
      %c0_23 = arith.constant 0 : index
      %c0_24 = arith.constant 0 : index
      %33 = vector.load %arg7[%c0_22, %c0_23, %c0_24] : memref<1x8x128xf32, #tpu.memory_space<vmem>>, vector<1x8x128xf32>
      tpu.vector_store %arg7[%c0_22, %c0_23, %c0_24], %32 {strides = array<i32>} : memref<1x8x128xf32, #tpu.memory_space<vmem>>, vector<1x8x128xf32>,
    } else {
    }
    return
  }
  func.func @transform_0(%arg0: i32, %arg1: i32, %arg2: i32, %arg3: i32) -> (i32, i32, i32) {
    %c0_i32 = arith.constant 0 : i32
    %c0_i32_0 = arith.constant 0 : i32
    return %arg0, %arg1, %c0_i32 : i32, i32, i32
  }
  func.func @transform_1(%arg0: i32, %arg1: i32, %arg2: i32, %arg3: i32) -> (i32, i32, i32) {
    %0 = arith.cmpi sge, %arg2, %arg0 : i32
    %c1_i32 = arith.constant 1 : i32
    %c0_i32 = arith.constant 0 : i32
    %1 = arith.select %0, %c1_i32, %c0_i32 : i32
    %2 = arith.addi %arg2, %1 : i32
    %c0_i32_0 = arith.constant 0 : i32
    %c0_i32_1 = arith.constant 0 : i32
    return %2, %arg3, %c0_i32_0 : i32, i32, i32
  }
  func.func @transform_2(%arg0: i32, %arg1: i32, %arg2: i32, %arg3: i32) -> (i32, i32, i32) {
    %0 = arith.cmpi sge, %arg2, %arg0 : i32
    %c1_i32 = arith.constant 1 : i32
    %c0_i32 = arith.constant 0 : i32
    %1 = arith.select %0, %c1_i32, %c0_i32 : i32
    %2 = arith.addi %arg2, %1 : i32
    %c0_i32_0 = arith.constant 0 : i32
    %c0_i32_1 = arith.constant 0 : i32
    return %2, %c0_i32_0, %arg3 : i32, i32, i32
  }
  func.func @transform_3(%arg0: i32, %arg1: i32, %arg2: i32, %arg3: i32) -> (i32, i32, i32) {
    %c0_i32 = arith.constant 0 : i32
    %c0_i32_0 = arith.constant 0 : i32
    return %arg0, %c0_i32, %arg1 : i32, i32, i32
  }
}

</mosaic_0001>

<llo_original>
// kernel: squeeze.1
$region0: #{squeeze.1}
  %s0 = inlined_call_operand.vmem [shape: f32[3,256], index: 0, kind: input, shape index: {}]
  %s1 = inlined_call_operand.hbm [shape: f32[1,1,3,16,16], index: 1, kind: output, shape index: {}]
  $region1: #{squeeze.1} parent=0
    #allocation0 [shape = 'u8[24576]{0}', space=vmem, size = 0x6000, scoped, tag = 'operand span for operand 1']
    #allocation1 [shape = 's32[1]{0}', space=sflag, size = 0x4, scoped, tag = 'scoped memory for squeeze.1']
    #allocation2 [shape = 'u8[8192]{0}', space=vmem, size = 0x2000, scoped, tag = 'scoped mem for input reshape']
    %2 = vsyncpa [#allocation1], 0
    %s4 = sshllo.u32 0, 4
    %s5 = scalar_lea.vmem %s0, 4
    %v6 = vld [vmem:[%s5] sm:%s4]
    %s7 = scalar_lea.vmem [#allocation2], 8
    %8 = vst [vmem:[%s7] sm:%s4] %v6
    %v9 = vld [vmem:[%s0] sm:%s4]
    %10 = vst [vmem:[#allocation2] sm:%s4] %v9
    %v11 = vld [vmem:[#allocation2] sm:$0x7]
    %vm12 = vcmask 130048
    %13 = vst.msk [vmem:[#allocation0] ss:$16 sm:$0x3] %vm12, %v11
    %s14 = scalar_lea.vmem [#allocation0], 30
    %15 = vst.msk [vmem:[%s14] sm:$0x4] %vm12, %v11
    %s16 = scalar_lea.vmem [#allocation2], 8
    %v17 = vld [vmem:[%s16] sm:$0x7]
    %vm18 = vcmask 130048
    %s19 = scalar_lea.vmem [#allocation0], 8
    %20 = vst.msk [vmem:[%s19] ss:$16 sm:$0x3] %vm18, %v17
    %s21 = scalar_lea.vmem [#allocation0], 38
    %22 = vst.msk [vmem:[%s21] sm:$0x4] %vm18, %v17
    %v23 = vld.sshfl [vmem:[#allocation2] sm:$0xff pattern:$0xaaa29180]
    %24 = vrot.lane.b32.xlu0 %v23, 112
    %v25 = vpop.permute.xlu0 %24
    %vm26 = vcmask 130048
    %s27 = scalar_lea.vmem [#allocation0], 1
    %28 = vst.msk [vmem:[%s27] ss:$8 sm:$0xf] %vm26, %v25
    %s29 = scalar_lea.vmem [#allocation0], 1
    %30 = vst.msk [vmem:[%s29] ss:$8 sm:$0x30] %vm26, %v25
    %v31 = vld.sshfl [vmem:[#allocation2] sm:$0xff pattern:$0xaaa29180]
    %32 = vrot.lane.b32.xlu0 %v31, 96
    %v33 = vpop.permute.xlu0 %32
    %vm34 = vcmask 130048
    %s35 = scalar_lea.vmem [#allocation0], 2
    %36 = vst.msk [vmem:[%s35] ss:$8 sm:$0xf] %vm34, %v33
    %s37 = scalar_lea.vmem [#allocation0], 2
    %38 = vst.msk [vmem:[%s37] ss:$8 sm:$0x30] %vm34, %v33
    %v39 = vld.sshfl [vmem:[#allocation2] sm:$0xff pattern:$0xaaa29180]
    %40 = vrot.lane.b32.xlu0 %v39, 80
    %v41 = vpop.permute.xlu0 %40
    %vm42 = vcmask 130048
    %s43 = scalar_lea.vmem [#allocation0], 3
    %44 = vst.msk [vmem:[%s43] ss:$8 sm:$0xf] %vm42, %v41
    %s45 = scalar_lea.vmem [#allocation0], 3
    %46 = vst.msk [vmem:[%s45] ss:$8 sm:$0x30] %vm42, %v41
    %v47 = vld.sshfl [vmem:[#allocation2] sm:$0xff pattern:$0xaaa29180]
    %48 = vrot.lane.b32.xlu0 %v47, 64
    %v49 = vpop.permute.xlu0 %48
    %vm50 = vcmask 130048
    %s51 = scalar_lea.vmem [#allocation0], 4
    %52 = vst.msk [vmem:[%s51] ss:$8 sm:$0xf] %vm50, %v49
    %s53 = scalar_lea.vmem [#allocation0], 4
    %54 = vst.msk [vmem:[%s53] ss:$8 sm:$0x30] %vm50, %v49
    %v55 = vld.sshfl [vmem:[#allocation2] sm:$0xff pattern:$0xaaa29180]
    %56 = vrot.lane.b32.xlu0 %v55, 48
    %v57 = vpop.permute.xlu0 %56
    %vm58 = vcmask 130048
    %s59 = scalar_lea.vmem [#allocation0], 5
    %60 = vst.msk [vmem:[%s59] ss:$8 sm:$0xf] %vm58, %v57
    %s61 = scalar_lea.vmem [#allocation0], 5
    %62 = vst.msk [vmem:[%s61] ss:$8 sm:$0x30] %vm58, %v57
    %v63 = vld.sshfl [vmem:[#allocation2] sm:$0xff pattern:$0xaaa29180]
    %64 = vrot.lane.b32.xlu0 %v63, 32
    %v65 = vpop.permute.xlu0 %64
    %vm66 = vcmask 130048
    %s67 = scalar_lea.vmem [#allocation0], 6
    %68 = vst.msk [vmem:[%s67] ss:$8 sm:$0xf] %vm66, %v65
    %s69 = scalar_lea.vmem [#allocation0], 6
    %70 = vst.msk [vmem:[%s69] ss:$8 sm:$0x30] %vm66, %v65
    %v71 = vld.sshfl [vmem:[#allocation2] sm:$0xff pattern:$0xaaa29180]
    %72 = vrot.lane.b32.xlu0 %v71, 16
    %v73 = vpop.permute.xlu0 %72
    %vm74 = vcmask 130048
    %s75 = scalar_lea.vmem [#allocation0], 7
    %76 = vst.msk [vmem:[%s75] ss:$8 sm:$0xf] %vm74, %v73
    %s77 = scalar_lea.vmem [#allocation0], 7
    %78 = vst.msk [vmem:[%s77] ss:$8 sm:$0x30] %vm74, %v73
    %s80 = ssub.s32 768, 768
    %81 = vsyncadd [#allocation1], %s80
    %s83 = sshll.u32 [#allocation0], 4
    %s84 = int_to_ptr.vmem [resolvable:$true] %s83
    %86 = dma.vmem_to_hbm [thread:$0]  %s84, 768, %s1, [#allocation1]
    %87 = dma.done [#allocation1], 768
    %88 = vsyncpa [#allocation1], 1

// kernel: _lambda_.1
$region0: #{_lambda_.1}
  #allocation0 [shape = 'u32[]', space=smem, size = 0x4, offset = 0x4, fixed_abs, tag = 'smem constant byte address 0x4 - core index']
  #allocation1 [shape = 'u32[144,128]{1,0:T(1,128)}', space=vmem, size = 0x12000, scoped, tag = 'internal scratch']
  #allocation2 [shape = 'f32[2,128]{1,0:T(2,128)}', space=vmem, size = 0x400, scoped, tag = 'scratch operand']
  %s0 = inlined_call_operand.vmem [shape: f32[3,256,32], index: 0, kind: input, shape index: {}, may-alias: {0,1}]
  %s1 = inlined_call_operand.vmem [shape: f32[3,256,32], index: 1, kind: input, shape index: {}, may-alias: {0,1}]
  %s2 = inlined_call_operand.vmem [shape: f32[3,2,256], index: 2, kind: input, shape index: {}]
  %s3 = inlined_call_operand.vmem [shape: f32[3,8,256], index: 3, kind: output, shape index: {}]
  %s4 = sld [smem:[#allocation0]]
  $region53: #{_lambda_.1} parent=0
    _
  %s6 = ssub.s32 1, %s4
  %s7 = scalar_select 0, %s6, %s4
  loop: start=0, step=1, limit=26
  $region2: #{_lambda_.1} parent=0 // loop_pre_header
    _
  $region3: #{_lambda_.1} parent=0 // loop_header
    %s9 = sphi 0, %s13
    %p10 = scmp.ge.s32.totalorder %s9, 26
    %s16 = sphi 0, %s42
    %s17 = sphi 0, %s38
    %s18 = sphi 0, %s34
    %s19 = sphi 0, %s30
    %s20 = sphi 0, %s16
    %s21 = sphi 0, %s17
    %s22 = sphi 0, %s18
    %s23 = sphi 0, %s19
    %s24 = sphi 0, %s20
    %s25 = sphi 0, %s21
    %s26 = sphi 0, %s22
    %s27 = sphi 0, %s23
    %s47 = sphi 0, %s49
    %s50 = sphi 0, %s47
    %s51 = sphi 0, %s50
    %s67 = sphi 0, %s51
    %s81 = sphi 0, %s83
    %s84 = sphi 0, %s81
    %s85 = sphi 0, %s84
    %s101 = sphi 0, %s85
    %s115 = sphi 0, %s117
    %s118 = sphi 0, %s115
    %s119 = sphi 0, %s118
    %s135 = sphi 0, %s119
    %s143 = sphi 0, %s145
    %s146 = sphi 0, %s143
    %s147 = sphi 0, %s146
    %s163 = sphi 0, %s147
  $region4: #{_lambda_.1} parent=0 // loop_header_branch
    %12 = sbr.rel (%p10) target = $region8
  $region5: #{_lambda_.1} parent=0 // loop_body
    %s14 = ssub.s32 %s9, 1
    %s15 = ssub.s32 %s9, 2
    %s28 = sadd.s32 1, %s19
    %p29 = scmp.ge.s32.totalorder %s28, 2
    %s30 = scalar_select %p29, 0, %s28
    %s31 = sadd.s32 1, %s18
    %s32 = scalar_select %p29, %s31, %s18
    %p33 = scmp.ge.s32.totalorder %s32, 2
    %s34 = scalar_select %p33, 0, %s32
    %s35 = sadd.s32 1, %s17
    %s36 = scalar_select %p33, %s35, %s17
    %p37 = scmp.ge.s32.totalorder %s36, 2
    %s38 = scalar_select %p37, 0, %s36
    %s39 = sadd.s32 1, %s16
    %s40 = scalar_select %p37, %s39, %s16
    %p41 = scmp.ge.s32.totalorder %s40, 3
    %s42 = scalar_select %p41, 0, %s40
    %s43 = ssub.s32 %s16, %s42
    %s44 = ssub.s32 %s17, %s38
    %s45 = sor.u32 %s43, %s44
    %p46 = scmp.eq.s32.totalorder %s45, 0
    %s48 = sadd.s32 %s47, 1
    %s49 = scalar_select %p46, %s47, %s48
    %p52 = pneg %p46
    %p53 = scmp.eq.s32.totalorder %s9, 23
    %p54 = por %p52, %p53
    %p55 = scmp.ne.s32.totalorder %s47, %s50
    %p56 = scmp.eq.s32.totalorder %s9, 0
    %p57 = por %p55, %p56
    %p58 = scmp.ne.s32.totalorder %s47, %s50
    %p59 = scmp.eq.s32.totalorder %s14, 23
    %p60 = por %p58, %p59
    %p61 = scmp.ne.s32.totalorder %s50, %s51
    %p62 = scmp.eq.s32.totalorder %s14, 0
    %p63 = por %p61, %p62
    %p64 = scmp.ne.s32.totalorder %s50, %s51
    %p65 = scmp.eq.s32.totalorder %s15, 23
    %p66 = por %p64, %p65
    %p68 = scmp.ne.s32.totalorder %s51, %s67
    %p69 = scmp.eq.s32.totalorder %s15, 0
    %p70 = por %p68, %p69
    %p71 = scmp.ge.s32.totalorder %s18, %s16
    %s72 = scalar_select %p71, 1, 0
    %s73 = sadd.s32 %s18, %s72
    %p74 = scmp.ge.s32.totalorder %s34, %s42
    %s75 = scalar_select %p74, 1, 0
    %s76 = sadd.s32 %s34, %s75
    %s77 = ssub.s32 %s73, %s76
    %s78 = ssub.s32 %s19, %s30
    %s79 = sor.u32 %s77, %s78
    %p80 = scmp.eq.s32.totalorder %s79, 0
    %s82 = sadd.s32 %s81, 1
    %s83 = scalar_select %p80, %s81, %s82
    %p86 = pneg %p80
    %p87 = scmp.eq.s32.totalorder %s9, 23
    %p88 = por %p86, %p87
    %p89 = scmp.ne.s32.totalorder %s81, %s84
    %p90 = scmp.eq.s32.totalorder %s9, 0
    %p91 = por %p89, %p90
    %p92 = scmp.ne.s32.totalorder %s81, %s84
    %p93 = scmp.eq.s32.totalorder %s14, 23
    %p94 = por %p92, %p93
    %p95 = scmp.ne.s32.totalorder %s84, %s85
    %p96 = scmp.eq.s32.totalorder %s14, 0
    %p97 = por %p95, %p96
    %p98 = scmp.ne.s32.totalorder %s84, %s85
    %p99 = scmp.eq.s32.totalorder %s15, 23
    %p100 = por %p98, %p99
    %p102 = scmp.ne.s32.totalorder %s85, %s101
    %p103 = scmp.eq.s32.totalorder %s15, 0
    %p104 = por %p102, %p103
    %p105 = scmp.ge.s32.totalorder %s18, %s16
    %s106 = scalar_select %p105, 1, 0
    %s107 = sadd.s32 %s18, %s106
    %p108 = scmp.ge.s32.totalorder %s34, %s42
    %s109 = scalar_select %p108, 1, 0
    %s110 = sadd.s32 %s34, %s109
    %s111 = ssub.s32 %s107, %s110
    %s112 = ssub.s32 %s19, %s30
    %s113 = sor.u32 %s111, %s112
    %p114 = scmp.eq.s32.totalorder %s113, 0
    %s116 = sadd.s32 %s115, 1
    %s117 = scalar_select %p114, %s115, %s116
    %p120 = pneg %p114
    %p121 = scmp.eq.s32.totalorder %s9, 23
    %p122 = por %p120, %p121
    %p123 = scmp.ne.s32.totalorder %s115, %s118
    %p124 = scmp.eq.s32.totalorder %s9, 0
    %p125 = por %p123, %p124
    %p126 = scmp.ne.s32.totalorder %s115, %s118
    %p127 = scmp.eq.s32.totalorder %s14, 23
    %p128 = por %p126, %p127
    %p129 = scmp.ne.s32.totalorder %s118, %s119
    %p130 = scmp.eq.s32.totalorder %s14, 0
    %p131 = por %p129, %p130
    %p132 = scmp.ne.s32.totalorder %s118, %s119
    %p133 = scmp.eq.s32.totalorder %s15, 23
    %p134 = por %p132, %p133
    %p136 = scmp.ne.s32.totalorder %s119, %s135
    %p137 = scmp.eq.s32.totalorder %s15, 0
    %p138 = por %p136, %p137
    %s139 = ssub.s32 %s16, %s42
    %s140 = ssub.s32 %s17, %s38
    %s141 = sor.u32 %s139, %s140
    %p142 = scmp.eq.s32.totalorder %s141, 0
    %s144 = sadd.s32 %s143, 1
    %s145 = scalar_select %p142, %s143, %s144
    %p148 = pneg %p142
    %p149 = scmp.eq.s32.totalorder %s9, 23
    %p150 = por %p148, %p149
    %p151 = scmp.ne.s32.totalorder %s143, %s146
    %p152 = scmp.eq.s32.totalorder %s9, 0
    %p153 = por %p151, %p152
    %p154 = scmp.ne.s32.totalorder %s143, %s146
    %p155 = scmp.eq.s32.totalorder %s14, 23
    %p156 = por %p154, %p155
    %p157 = scmp.ne.s32.totalorder %s146, %s147
    %p158 = scmp.eq.s32.totalorder %s14, 0
    %p159 = por %p157, %p158
    %p160 = scmp.ne.s32.totalorder %s146, %s147
    %p161 = scmp.eq.s32.totalorder %s15, 23
    %p162 = por %p160, %p161
    %p164 = scmp.ne.s32.totalorder %s147, %s163
    %p165 = scmp.eq.s32.totalorder %s15, 0
    %p166 = por %p164, %p165
    %p167 = scmp.le.s32.totalorder 1, %s9
    %p168 = scmp.lt.s32.totalorder %s9, 25
    %p169 = pnand %p167, %p168
    %p170 = pneg %p169
    // Predicated region
    $region9: #{_lambda_.1} parent=5 // pred_check
      _
    $region10: #{_lambda_.1} parent=5 // pred_check_branch
      %172 = sbr.rel (%p169) target = $region12
    $region11: #{_lambda_.1} parent=5 // pred_region
      %s173 = ssub.s32 %s9, 1
    $region12: #{_lambda_.1} parent=5 // pred_fallthru
      _
    %p174 = scmp.lt.s32.totalorder %s9, 24
    // Predicated region
    $region13: #{_lambda_.1} parent=5 // pred_check
      %p175 = pneg %p174
    $region14: #{_lambda_.1} parent=5 // pred_check_branch
      %177 = sbr.rel (%p175) target = $region16
    $region15: #{_lambda_.1} parent=5 // pred_region
      // Predicated region
      $region17: #{_lambda_.1} parent=15 // pred_check
        %p178 = pneg %p57
      $region18: #{_lambda_.1} parent=15 // pred_check_branch
        %180 = sbr.rel (%p178) target = $region20
      $region19: #{_lambda_.1} parent=15 // pred_region
        %s181 = smul.u32 16, %s17
        %p182 = scmp.lt.s32.totalorder %s16, 2
        %s183 = scalar_select %p182, %s16, 2
        %p184 = scmp.lt.s32.totalorder %s181, 31
        %s185 = scalar_select %p184, %s181, 31
        %s186 = smul.addr %s183, 32
        %s187 = sadd.s32 %s185, %s186
        %s188 = smul.addr %s187, 8
        %s189 = scalar_lea.vmem %s0, %s188
        %s190 = smul.u32 16, %s17
      $region20: #{_lambda_.1} parent=15 // pred_fallthru
        _
      // Predicated region
      $region21: #{_lambda_.1} parent=15 // pred_check
        %p191 = pneg %p91
      $region22: #{_lambda_.1} parent=15 // pred_check_branch
        %193 = sbr.rel (%p191) target = $region24
      $region23: #{_lambda_.1} parent=15 // pred_region
        %p194 = scmp.ge.s32.totalorder %s18, %s16
        %s195 = scalar_select %p194, 1, 0
        %s196 = sadd.s32 %s18, %s195
        %s197 = smul.u32 16, %s19
        %p198 = scmp.lt.s32.totalorder %s196, 2
        %s199 = scalar_select %p198, %s196, 2
        %p200 = scmp.lt.s32.totalorder %s197, 31
        %s201 = scalar_select %p200, %s197, 31
        %s202 = smul.addr %s199, 32
        %s203 = sadd.s32 %s201, %s202
        %s204 = smul.addr %s203, 8
        %s205 = scalar_lea.vmem %s1, %s204
        %p206 = scmp.ge.s32.totalorder %s18, %s16
        %s207 = scalar_select %p206, 1, 0
        %s208 = sadd.s32 %s18, %s207
        %s209 = smul.u32 16, %s19
      $region24: #{_lambda_.1} parent=15 // pred_fallthru
        _
      // Predicated region
      $region25: #{_lambda_.1} parent=15 // pred_check
        %p210 = pneg %p125
      $region26: #{_lambda_.1} parent=15 // pred_check_branch
        %212 = sbr.rel (%p210) target = $region28
      $region27: #{_lambda_.1} parent=15 // pred_region
        %p213 = scmp.ge.s32.totalorder %s18, %s16
        %s214 = scalar_select %p213, 1, 0
        %s215 = sadd.s32 %s18, %s214
        %p216 = scmp.lt.s32.totalorder %s215, 2
        %s217 = scalar_select %p216, %s215, 2
        %p218 = scmp.lt.s32.totalorder %s19, 1
        %s219 = scalar_select %p218, %s19, 1
        %s220 = smul.addr %s217, 2
        %s221 = sadd.s32 %s219, %s220
        %s222 = smul.addr %s221, 2
        %s223 = scalar_lea.vmem %s2, %s222
        %p224 = scmp.ge.s32.totalorder %s18, %s16
        %s225 = scalar_select %p224, 1, 0
        %s226 = sadd.s32 %s18, %s225
      $region28: #{_lambda_.1} parent=15 // pred_fallthru
        _
    $region16: #{_lambda_.1} parent=5 // pred_fallthru
      _
    %p227 = scmp.le.s32.totalorder 1, %s9
    %p228 = scmp.lt.s32.totalorder %s9, 25
    %p229 = pnand %p227, %p228
    %p230 = pneg %p229
    // Predicated region
    $region29: #{_lambda_.1} parent=5 // pred_check
      _
    $region30: #{_lambda_.1} parent=5 // pred_check_branch
      %232 = sbr.rel (%p229) target = $region32
    $region31: #{_lambda_.1} parent=5 // pred_region
      %s233 = ssub.s32 %s9, 1
      %s234 = smul.u32 16, %s21
      %p235 = scmp.lt.s32.totalorder %s20, 2
      %s236 = scalar_select %p235, %s20, 2
      %p237 = scmp.lt.s32.totalorder %s234, 31
      %s238 = scalar_select %p237, %s234, 31
      %s239 = smul.addr %s236, 32
      %s240 = sadd.s32 %s238, %s239
      %s241 = smul.addr %s240, 8
      %s242 = scalar_lea.vmem %s0, %s241
      %p243 = pneg %p63
      %p244 = pneg %p60
      %p245 = scmp.ge.s32.totalorder %s22, %s20
      %s246 = scalar_select %p245, 1, 0
      %s247 = sadd.s32 %s22, %s246
      %s248 = smul.u32 16, %s23
      %p249 = scmp.lt.s32.totalorder %s247, 2
      %s250 = scalar_select %p249, %s247, 2
      %p251 = scmp.lt.s32.totalorder %s248, 31
      %s252 = scalar_select %p251, %s248, 31
      %s253 = smul.addr %s250, 32
      %s254 = sadd.s32 %s252, %s253
      %s255 = smul.addr %s254, 8
      %s256 = scalar_lea.vmem %s1, %s255
      %p257 = pneg %p97
      %p258 = pneg %p94
      %p259 = scmp.ge.s32.totalorder %s22, %s20
      %s260 = scalar_select %p259, 1, 0
      %s261 = sadd.s32 %s22, %s260
      %p262 = scmp.lt.s32.totalorder %s261, 2
      %s263 = scalar_select %p262, %s261, 2
      %p264 = scmp.lt.s32.totalorder %s23, 1
      %s265 = scalar_select %p264, %s23, 1
      %s266 = smul.addr %s263, 2
      %s267 = sadd.s32 %s265, %s266
      %s268 = smul.addr %s267, 2
      %s269 = scalar_lea.vmem %s2, %s268
      %p270 = pneg %p131
      %p271 = pneg %p128
      %p272 = pneg %p159
      %p273 = pneg %p156
      %p274 = scmp.lt.s32.totalorder %s20, 2
      %s275 = scalar_select %p274, %s20, 2
      %p276 = scmp.lt.s32.totalorder %s21, 1
      %s277 = scalar_select %p276, %s21, 1
      %s278 = smul.addr %s275, 2
      %s279 = sadd.s32 %s277, %s278
      %s280 = smul.addr %s279, 8
      %s281 = scalar_lea.vmem %s3, %s280
      %s282 = smul.u32 16, %s21
      %p283 = scmp.lt.s32.totalorder %s20, 2
      %s284 = scalar_select %p283, %s20, 2
      %p285 = scmp.lt.s32.totalorder %s282, 31
      %s286 = scalar_select %p285, %s282, 31
      %s287 = smul.addr %s284, 32
      %s288 = sadd.s32 %s286, %s287
      %s289 = smul.addr %s288, 8
      %s290 = scalar_lea.vmem %s0, %s289
      %s291 = smul.u32 16, %s21
      %p292 = scmp.ge.s32.totalorder %s22, %s20
      %s293 = scalar_select %p292, 1, 0
      %s294 = sadd.s32 %s22, %s293
      %s295 = smul.u32 16, %s23
      %p296 = scmp.lt.s32.totalorder %s294, 2
      %s297 = scalar_select %p296, %s294, 2
      %p298 = scmp.lt.s32.totalorder %s295, 31
      %s299 = scalar_select %p298, %s295, 31
      %s300 = smul.addr %s297, 32
      %s301 = sadd.s32 %s299, %s300
      %s302 = smul.addr %s301, 8
      %s303 = scalar_lea.vmem %s1, %s302
      %p304 = scmp.ge.s32.totalorder %s22, %s20
      %s305 = scalar_select %p304, 1, 0
      %s306 = sadd.s32 %s22, %s305
      %s307 = smul.u32 16, %s23
      %p308 = scmp.ge.s32.totalorder %s22, %s20
      %s309 = scalar_select %p308, 1, 0
      %s310 = sadd.s32 %s22, %s309
      %p311 = scmp.lt.s32.totalorder %s310, 2
      %s312 = scalar_select %p311, %s310, 2
      %p313 = scmp.lt.s32.totalorder %s23, 1
      %s314 = scalar_select %p313, %s23, 1
      %s315 = smul.addr %s312, 2
      %s316 = sadd.s32 %s314, %s315
      %s317 = smul.addr %s316, 2
      %s318 = scalar_lea.vmem %s2, %s317
      %p319 = scmp.ge.s32.totalorder %s22, %s20
      %s320 = scalar_select %p319, 1, 0
      %s321 = sadd.s32 %s22, %s320
      %p322 = scmp.lt.s32.totalorder %s20, 2
      %s323 = scalar_select %p322, %s20, 2
      %p324 = scmp.lt.s32.totalorder %s21, 1
      %s325 = scalar_select %p324, %s21, 1
      %s326 = smul.addr %s323, 2
      %s327 = sadd.s32 %s325, %s326
      %s328 = smul.addr %s327, 8
      %s329 = scalar_lea.vmem %s3, %s328
      %p330 = scmp.eq.s32.totalorder %s22, 0
      %p331 = scmp.eq.s32.totalorder %s23, 0
      %p332 = pnand %p330, %p331
      %p333 = pneg %p332
      // Predicated region
      $region33: #{_lambda_.1} parent=31 // pred_check
        _
      $region34: #{_lambda_.1} parent=31 // pred_check_branch
        %335 = sbr.rel (%p332) target = $region36
      $region35: #{_lambda_.1} parent=31 // pred_region
        %336 = vst [vmem:[#allocation2] sm:$0x3] 0.0
      $region36: #{_lambda_.1} parent=31 // pred_fallthru
        _
      %v337 = vld [vmem:[%s290] sm:$0xff]
      %v338 = vld [vmem:[%s290 + $0x8] sm:$0xff]
      %v339 = vld [vmem:[%s290 + $0x10] sm:$0xff]
      %v340 = vld [vmem:[%s290 + $0x18] sm:$0xff]
      %v341 = vld [vmem:[%s290 + $0x20] sm:$0xff]
      %v342 = vld [vmem:[%s290 + $0x28] sm:$0xff]
      %v343 = vld [vmem:[%s290 + $0x30] sm:$0xff]
      %v344 = vld [vmem:[%s290 + $0x38] sm:$0xff]
      %v345 = vld [vmem:[%s290 + $0x40] sm:$0xff]
      %v346 = vld [vmem:[%s290 + $0x48] sm:$0xff]
      %v347 = vld [vmem:[%s290 + $0x50] sm:$0xff]
      %v348 = vld [vmem:[%s290 + $0x58] sm:$0xff]
      %v349 = vld [vmem:[%s290 + $0x60] sm:$0xff]
      %v350 = vld [vmem:[%s290 + $0x68] sm:$0xff]
      %v351 = vld [vmem:[%s290 + $0x70] sm:$0xff]
      %v352 = vld [vmem:[%s290 + $0x78] sm:$0xff]
      %v353 = vld [vmem:[%s303] sm:$0xff]
      %v354 = vld [vmem:[%s303 + $0x8] sm:$0xff]
      %v355 = vld [vmem:[%s303 + $0x10] sm:$0xff]
      %v356 = vld [vmem:[%s303 + $0x18] sm:$0xff]
      %v357 = vld [vmem:[%s303 + $0x20] sm:$0xff]
      %v358 = vld [vmem:[%s303 + $0x28] sm:$0xff]
      %v359 = vld [vmem:[%s303 + $0x30] sm:$0xff]
      %v360 = vld [vmem:[%s303 + $0x38] sm:$0xff]
      %v361 = vld [vmem:[%s303 + $0x40] sm:$0xff]
      %v362 = vld [vmem:[%s303 + $0x48] sm:$0xff]
      %v363 = vld [vmem:[%s303 + $0x50] sm:$0xff]
      %v364 = vld [vmem:[%s303 + $0x58] sm:$0xff]
      %v365 = vld [vmem:[%s303 + $0x60] sm:$0xff]
      %v366 = vld [vmem:[%s303 + $0x68] sm:$0xff]
      %v367 = vld [vmem:[%s303 + $0x70] sm:$0xff]
      %v368 = vld [vmem:[%s303 + $0x78] sm:$0xff]
      %vm369 = vcmask 261120
      %v371 = vsel %vm369, %v353, 0
      %v374 = vsel %vm369, %v354, 0
      %v377 = vsel %vm369, %v355, 0
      %v380 = vsel %vm369, %v356, 0
      %v383 = vsel %vm369, %v357, 0
      %v386 = vsel %vm369, %v358, 0
      %v389 = vsel %vm369, %v359, 0
      %v392 = vsel %vm369, %v360, 0
      %v395 = vsel %vm369, %v361, 0
      %v398 = vsel %vm369, %v362, 0
      %v401 = vsel %vm369, %v363, 0
      %v404 = vsel %vm369, %v364, 0
      %v407 = vsel %vm369, %v365, 0
      %v410 = vsel %vm369, %v366, 0
      %v413 = vsel %vm369, %v367, 0
      %v416 = vsel %vm369, %v368, 0
      %v419 = vsel %vm369, %v337, 0
      %v422 = vsel %vm369, %v338, 0
      %v425 = vsel %vm369, %v339, 0
      %v428 = vsel %vm369, %v340, 0
      %v431 = vsel %vm369, %v341, 0
      %v434 = vsel %vm369, %v342, 0
      %v437 = vsel %vm369, %v343, 0
      %v440 = vsel %vm369, %v344, 0
      %v443 = vsel %vm369, %v345, 0
      %v446 = vsel %vm369, %v346, 0
      %v449 = vsel %vm369, %v347, 0
      %v452 = vsel %vm369, %v348, 0
      %v455 = vsel %vm369, %v349, 0
      %v458 = vsel %vm369, %v350, 0
      %v461 = vsel %vm369, %v351, 0
      %v464 = vsel %vm369, %v352, 0
      %466 = vmatprep.subr.mxu0 0.0
      %467 = vmatpush1.xpose.msra.mxu0 %v419
      %468 = vmatprep.subr.mxu0 0.0
      %469 = vmatpush1.xpose.msra.mxu0 %v422
      %470 = vmatprep.subr.mxu0 0.0
      %471 = vmatpush1.xpose.msra.mxu0 %v425
      %472 = vmatprep.subr.mxu0 0.0
      %473 = vmatpush1.xpose.msra.mxu0 %v428
      %474 = vmatprep.subr.mxu0 0.0
      %475 = vmatpush1.xpose.msra.mxu0 %v431
      %476 = vmatprep.subr.mxu0 0.0
      %477 = vmatpush1.xpose.msra.mxu0 %v434
      %478 = vmatprep.subr.mxu0 0.0
      %479 = vmatpush1.xpose.msra.mxu0 %v437
      %480 = vmatprep.subr.mxu0 0.0
      %481 = vmatpush1.xpose.msra.mxu0 %v440
      %482 = vmatprep.subr.mxu0 0.0
      %483 = vmatpush1.xpose.msra.mxu0 %v443
      %484 = vmatprep.subr.mxu0 0.0
      %485 = vmatpush1.xpose.msra.mxu0 %v446
      %486 = vmatprep.subr.mxu0 0.0
      %487 = vmatpush1.xpose.msra.mxu0 %v449
      %488 = vmatprep.subr.mxu0 0.0
      %489 = vmatpush1.xpose.msra.mxu0 %v452
      %490 = vmatprep.subr.mxu0 0.0
      %491 = vmatpush1.xpose.msra.mxu0 %v455
      %492 = vmatprep.subr.mxu0 0.0
      %493 = vmatpush1.xpose.msra.mxu0 %v458
      %494 = vmatprep.subr.mxu0 0.0
      %495 = vmatpush1.xpose.msra.mxu0 %v461
      %496 = vmatprep.subr.mxu0 0.0
      %497 = vmatpush1.xpose.msra.mxu0 %v464
      %498 = vmatprep.subr.mxu0 0.0
      %499 = vmatpush1.xpose.msra.mxu0 0.0
      %500 = vmatprep.subr.mxu0 0.0
      %501 = vmatpush1.xpose.msra.mxu0 0.0
      %502 = vmatprep.subr.mxu0 0.0
      %503 = vmatpush1.xpose.msra.mxu0 0.0
      %504 = vmatprep.subr.mxu0 0.0
      %505 = vmatpush1.xpose.msra.mxu0 0.0
      %506 = vmatprep.subr.mxu0 0.0
      %507 = vmatpush1.xpose.msra.mxu0 0.0
      %508 = vmatprep.subr.mxu0 0.0
      %509 = vmatpush1.xpose.msra.mxu0 0.0
      %510 = vmatprep.subr.mxu0 0.0
      %511 = vmatpush1.xpose.msra.mxu0 0.0
      %512 = vmatprep.subr.mxu0 0.0
      %513 = vmatpush1.xpose.msra.mxu0 0.0
      %514 = vmatprep.subr.mxu0 0.0
      %515 = vmatpush1.xpose.msra.mxu0 0.0
      %516 = vmatprep.subr.mxu0 0.0
      %517 = vmatpush1.xpose.msra.mxu0 0.0
      %518 = vmatprep.subr.mxu0 0.0
      %519 = vmatpush1.xpose.msra.mxu0 0.0
      %520 = vmatprep.subr.mxu0 0.0
      %521 = vmatpush1.xpose.msra.mxu0 0.0
      %522 = vmatprep.subr.mxu0 0.0
      %523 = vmatpush1.xpose.msra.mxu0 0.0
      %524 = vmatprep.subr.mxu0 0.0
      %525 = vmatpush1.xpose.msra.mxu0 0.0
      %526 = vmatprep.subr.mxu0 0.0
      %527 = vmatpush1.xpose.msra.mxu0 0.0
      %528 = vmatprep.subr.mxu0 0.0
      %529 = vmatpush1.xpose.msra.mxu0 0.0
      %530 = vmatprep.mubr.f32.mxu0 0.0
      %531 = vmatmul.mubr.f32.gmra.mrb[0].mxu0 %v371
      %v532 = vpop.f32.mrb[0].mxu0
      %v533 = vadd.f32 0.0, %v532
      %v534 = vpop.f32.mrb[0].mxu0
      %535 = vmatprep.mubr.f32.mxu0 0.0
      %536 = vmatmul.mubr.f32.gmra.mrb[0].mxu0 %v374
      %v537 = vpop.f32.mrb[0].mxu0
      %v538 = vadd.f32 0.0, %v537
      %v539 = vpop.f32.mrb[0].mxu0
      %540 = vmatprep.mubr.f32.mxu0 0.0
      %541 = vmatmul.mubr.f32.gmra.mrb[0].mxu0 %v377
      %v542 = vpop.f32.mrb[0].mxu0
      %v543 = vadd.f32 0.0, %v542
      %v544 = vpop.f32.mrb[0].mxu0
      %545 = vmatprep.mubr.f32.mxu0 0.0
      %546 = vmatmul.mubr.f32.gmra.mrb[0].mxu0 %v380
      %v547 = vpop.f32.mrb[0].mxu0
      %v548 = vadd.f32 0.0, %v547
      %v549 = vpop.f32.mrb[0].mxu0
      %550 = vmatprep.mubr.f32.mxu0 0.0
      %551 = vmatmul.mubr.f32.gmra.mrb[0].mxu0 %v383
      %v552 = vpop.f32.mrb[0].mxu0
      %v553 = vadd.f32 0.0, %v552
      %v554 = vpop.f32.mrb[0].mxu0
      %555 = vmatprep.mubr.f32.mxu0 0.0
      %556 = vmatmul.mubr.f32.gmra.mrb[0].mxu0 %v386
      %v557 = vpop.f32.mrb[0].mxu0
      %v558 = vadd.f32 0.0, %v557
      %v559 = vpop.f32.mrb[0].mxu0
      %560 = vmatprep.mubr.f32.mxu0 0.0
      %561 = vmatmul.mubr.f32.gmra.mrb[0].mxu0 %v389
      %v562 = vpop.f32.mrb[0].mxu0
      %v563 = vadd.f32 0.0, %v562
      %v564 = vpop.f32.mrb[0].mxu0
      %565 = vmatprep.mubr.f32.mxu0 0.0
      %566 = vmatmul.mubr.f32.gmra.mrb[0].mxu0 %v392
      %v567 = vpop.f32.mrb[0].mxu0
      %v568 = vadd.f32 0.0, %v567
      %v569 = vpop.f32.mrb[0].mxu0
      %570 = vmatprep.mubr.f32.mxu0 0.0
      %571 = vmatmul.mubr.f32.gmra.mrb[0].mxu0 %v395
      %v572 = vpop.f32.mrb[0].mxu0
      %v573 = vadd.f32 0.0, %v572
      %v574 = vpop.f32.mrb[0].mxu0
      %575 = vmatprep.mubr.f32.mxu0 0.0
      %576 = vmatmul.mubr.f32.gmra.mrb[0].mxu0 %v398
      %v577 = vpop.f32.mrb[0].mxu0
      %v578 = vadd.f32 0.0, %v577
      %v579 = vpop.f32.mrb[0].mxu0
      %580 = vmatprep.mubr.f32.mxu0 0.0
      %581 = vmatmul.mubr.f32.gmra.mrb[0].mxu0 %v401
      %v582 = vpop.f32.mrb[0].mxu0
      %v583 = vadd.f32 0.0, %v582
      %v584 = vpop.f32.mrb[0].mxu0
      %585 = vmatprep.mubr.f32.mxu0 0.0
      %586 = vmatmul.mubr.f32.gmra.mrb[0].mxu0 %v404
      %v587 = vpop.f32.mrb[0].mxu0
      %v588 = vadd.f32 0.0, %v587
      %v589 = vpop.f32.mrb[0].mxu0
      %590 = vmatprep.mubr.f32.mxu0 0.0
      %591 = vmatmul.mubr.f32.gmra.mrb[0].mxu0 %v407
      %v592 = vpop.f32.mrb[0].mxu0
      %v593 = vadd.f32 0.0, %v592
      %v594 = vpop.f32.mrb[0].mxu0
      %595 = vmatprep.mubr.f32.mxu0 0.0
      %596 = vmatmul.mubr.f32.gmra.mrb[0].mxu0 %v410
      %v597 = vpop.f32.mrb[0].mxu0
      %v598 = vadd.f32 0.0, %v597
      %v599 = vpop.f32.mrb[0].mxu0
      %600 = vmatprep.mubr.f32.mxu0 0.0
      %601 = vmatmul.mubr.f32.gmra.mrb[0].mxu0 %v413
      %v602 = vpop.f32.mrb[0].mxu0
      %v603 = vadd.f32 0.0, %v602
      %v604 = vpop.f32.mrb[0].mxu0
      %605 = vmatprep.mubr.f32.mxu0 0.0
      %606 = vmatmul.mubr.f32.gmra.mrb[0].mxu0 %v416
      %v607 = vpop.f32.mrb[0].mxu0
      %v608 = vadd.f32 0.0, %v607
      %v609 = vpop.f32.mrb[0].mxu0
      %610 = vdwg.mxu0
      %v611 = vmul.f32 %v533, 30.0
      %v612 = vmul.f32 %v538, 30.0
      %v613 = vmul.f32 %v543, 30.0
      %v614 = vmul.f32 %v548, 30.0
      %v615 = vmul.f32 %v553, 30.0
      %v616 = vmul.f32 %v558, 30.0
      %v617 = vmul.f32 %v563, 30.0
      %v618 = vmul.f32 %v568, 30.0
      %v619 = vmul.f32 %v573, 30.0
      %v620 = vmul.f32 %v578, 30.0
      %v621 = vmul.f32 %v583, 30.0
      %v622 = vmul.f32 %v588, 30.0
      %v623 = vmul.f32 %v593, 30.0
      %v624 = vmul.f32 %v598, 30.0
      %v625 = vmul.f32 %v603, 30.0
      %v626 = vmul.f32 %v608, 30.0
      %v627 = vsub.f32 %v611, 30.0
      %v628 = vsub.f32 %v612, 30.0
      %v629 = vsub.f32 %v613, 30.0
      %v630 = vsub.f32 %v614, 30.0
      %v631 = vsub.f32 %v615, 30.0
      %v632 = vsub.f32 %v616, 30.0
      %v633 = vsub.f32 %v617, 30.0
      %v634 = vsub.f32 %v618, 30.0
      %v635 = vsub.f32 %v619, 30.0
      %v636 = vsub.f32 %v620, 30.0
      %v637 = vsub.f32 %v621, 30.0
      %v638 = vsub.f32 %v622, 30.0
      %v639 = vsub.f32 %v623, 30.0
      %v640 = vsub.f32 %v624, 30.0
      %v641 = vsub.f32 %v625, 30.0
      %v642 = vsub.f32 %v626, 30.0
      %v643 = vmul.f32 %v627, 1.442695
      %v644 = vpow.pop %v643
      %v645 = vmul.f32 %v628, 1.442695
      %v646 = vpow.pop %v645
      %v647 = vmul.f32 %v629, 1.442695
      %v648 = vpow.pop %v647
      %v649 = vmul.f32 %v630, 1.442695
      %v650 = vpow.pop %v649
      %v651 = vmul.f32 %v631, 1.442695
      %v652 = vpow.pop %v651
      %v653 = vmul.f32 %v632, 1.442695
      %v654 = vpow.pop %v653
      %v655 = vmul.f32 %v633, 1.442695
      %v656 = vpow.pop %v655
      %v657 = vmul.f32 %v634, 1.442695
      %v658 = vpow.pop %v657
      %v659 = vmul.f32 %v635, 1.442695
      %v660 = vpow.pop %v659
      %v661 = vmul.f32 %v636, 1.442695
      %v662 = vpow.pop %v661
      %v663 = vmul.f32 %v637, 1.442695
      %v664 = vpow.pop %v663
      %v665 = vmul.f32 %v638, 1.442695
      %v666 = vpow.pop %v665
      %v667 = vmul.f32 %v639, 1.442695
      %v668 = vpow.pop %v667
      %v669 = vmul.f32 %v640, 1.442695
      %v670 = vpow.pop %v669
      %v671 = vmul.f32 %v641, 1.442695
      %v672 = vpow.pop %v671
      %v673 = vmul.f32 %v642, 1.442695
      %v674 = vpow.pop %v673
      %v675 = vld [vmem:[#allocation2] sm:$0x3]
      %v676 = vld [vmem:[%s318] sm:$0x3]
      %677 = vmatprep.subr.mxu0 0.0
      %678 = vmatpush1.msra.mxu0 %v644
      %679 = vmatprep.subr.mxu0 0.0
      %680 = vmatpush1.msra.mxu0 %v646
      %681 = vmatprep.subr.mxu0 0.0
      %682 = vmatpush1.msra.mxu0 %v648
      %683 = vmatprep.subr.mxu0 0.0
      %684 = vmatpush1.msra.mxu0 %v650
      %685 = vmatprep.subr.mxu0 0.0
      %686 = vmatpush1.msra.mxu0 %v652
      %687 = vmatprep.subr.mxu0 0.0
      %688 = vmatpush1.msra.mxu0 %v654
      %689 = vmatprep.subr.mxu0 0.0
      %690 = vmatpush1.msra.mxu0 %v656
      %691 = vmatprep.subr.mxu0 0.0
      %692 = vmatpush1.msra.mxu0 %v658
      %693 = vmatprep.subr.mxu0 0.0
      %694 = vmatpush1.msra.mxu0 %v660
      %695 = vmatprep.subr.mxu0 0.0
      %696 = vmatpush1.msra.mxu0 %v662
      %697 = vmatprep.subr.mxu0 0.0
      %698 = vmatpush1.msra.mxu0 %v664
      %699 = vmatprep.subr.mxu0 0.0
      %700 = vmatpush1.msra.mxu0 %v666
      %701 = vmatprep.subr.mxu0 0.0
      %702 = vmatpush1.msra.mxu0 %v668
      %703 = vmatprep.subr.mxu0 0.0
      %704 = vmatpush1.msra.mxu0 %v670
      %705 = vmatprep.subr.mxu0 0.0
      %706 = vmatpush1.msra.mxu0 %v672
      %707 = vmatprep.subr.mxu0 0.0
      %708 = vmatpush1.msra.mxu0 %v674
      %709 = vmatprep.subr.mxu0 0.0
      %710 = vmatpush1.msra.mxu0 0.0
      %711 = vmatprep.subr.mxu0 0.0
      %712 = vmatpush1.msra.mxu0 0.0
      %713 = vmatprep.subr.mxu0 0.0
      %714 = vmatpush1.msra.mxu0 0.0
      %715 = vmatprep.subr.mxu0 0.0
      %716 = vmatpush1.msra.mxu0 0.0
      %717 = vmatprep.subr.mxu0 0.0
      %718 = vmatpush1.msra.mxu0 0.0
      %719 = vmatprep.subr.mxu0 0.0
      %720 = vmatpush1.msra.mxu0 0.0
      %721 = vmatprep.subr.mxu0 0.0
      %722 = vmatpush1.msra.mxu0 0.0
      %723 = vmatprep.subr.mxu0 0.0
      %724 = vmatpush1.msra.mxu0 0.0
      %725 = vmatprep.subr.mxu0 0.0
      %726 = vmatpush1.msra.mxu0 0.0
      %727 = vmatprep.subr.mxu0 0.0
      %728 = vmatpush1.msra.mxu0 0.0
      %729 = vmatprep.subr.mxu0 0.0
      %730 = vmatpush1.msra.mxu0 0.0
      %731 = vmatprep.subr.mxu0 0.0
      %732 = vmatpush1.msra.mxu0 0.0
      %733 = vmatprep.subr.mxu0 0.0
      %734 = vmatpush1.msra.mxu0 0.0
      %735 = vmatprep.subr.mxu0 0.0
      %736 = vmatpush1.msra.mxu0 0.0
      %737 = vmatprep.subr.mxu0 0.0
      %738 = vmatpush1.msra.mxu0 0.0
      %739 = vmatprep.subr.mxu0 0.0
      %740 = vmatpush1.msra.mxu0 0.0
      %741 = vmatprep.mubr.f32.mxu0 0.0
      %742 = vmatmul.mubr.f32.gmra.mrb[0].mxu0 %v676
      %v743 = vpop.f32.mrb[0].mxu0
      %v744 = vadd.f32 0.0, %v743
      %v745 = vpop.f32.mrb[0].mxu0
      %746 = vdwg.mxu0
      %v747 = vadd.f32 %v675, %v744
      %748 = vst [vmem:[#allocation2] sm:$0x3] %v747
      %p749 = scmp.eq.s32.totalorder %s22, 1
      %p750 = scmp.eq.s32.totalorder %s23, 1
      %p751 = pnand %p749, %p750
      %p752 = pneg %p751
      // Predicated region
      $region37: #{_lambda_.1} parent=31 // pred_check
        _
      $region38: #{_lambda_.1} parent=31 // pred_check_branch
        %754 = sbr.rel (%p751) target = $region40
      $region39: #{_lambda_.1} parent=31 // pred_region
        %v755 = vld [vmem:[#allocation2] sm:$0x1]
        %v756 = vld [vmem:[#allocation2 + $0x1] sm:$0x1]
        %v757 = vrcp.pop %v756
        %v758 = vmul.f32 %v755, %v757
        %v759 = vlaneseq
        %v760 = vshrl.u32 %v759, 7
        %v761 = vsub.s32 0, %v760
        %v762 = vrot.slane %v758, %v761
        %763 = vst [vmem:[%s329] sm:$0xff] %v762
      $region40: #{_lambda_.1} parent=31 // pred_fallthru
        _
      %p764 = scmp.lt.s32.totalorder %s20, 2
      %s765 = scalar_select %p764, %s20, 2
      %p766 = scmp.lt.s32.totalorder %s21, 1
      %s767 = scalar_select %p766, %s21, 1
      %s768 = smul.addr %s765, 2
      %s769 = sadd.s32 %s767, %s768
      %s770 = smul.addr %s769, 8
      %s771 = scalar_lea.vmem %s3, %s770
      // Predicated region
      $region41: #{_lambda_.1} parent=31 // pred_check
        %p772 = pneg %p156
      $region42: #{_lambda_.1} parent=31 // pred_check_branch
        %774 = sbr.rel (%p772) target = $region44
      $region43: #{_lambda_.1} parent=31 // pred_region
        _
      $region44: #{_lambda_.1} parent=31 // pred_fallthru
        _
    $region32: #{_lambda_.1} parent=5 // pred_fallthru
      _
    %p775 = scmp.le.s32.totalorder 2, %s9
    // Predicated region
    $region45: #{_lambda_.1} parent=5 // pred_check
      %p776 = pneg %p775
    $region46: #{_lambda_.1} parent=5 // pred_check_branch
      %778 = sbr.rel (%p776) target = $region48
    $region47: #{_lambda_.1} parent=5 // pred_region
      %s779 = ssub.s32 %s9, 2
      // Predicated region
      $region49: #{_lambda_.1} parent=47 // pred_check
        %p780 = pneg %p162
      $region50: #{_lambda_.1} parent=47 // pred_check_branch
        %782 = sbr.rel (%p780) target = $region52
      $region51: #{_lambda_.1} parent=47 // pred_region
        %p783 = scmp.lt.s32.totalorder %s24, 2
        %s784 = scalar_select %p783, %s24, 2
        %p785 = scmp.lt.s32.totalorder %s25, 1
        %s786 = scalar_select %p785, %s25, 1
        %s787 = smul.addr %s784, 2
        %s788 = sadd.s32 %s786, %s787
        %s789 = smul.addr %s788, 8
        %s790 = scalar_lea.vmem %s3, %s789
      $region52: #{_lambda_.1} parent=47 // pred_fallthru
        _
    $region48: #{_lambda_.1} parent=5 // pred_fallthru
      _
  $region6: #{_lambda_.1} parent=0 // loop_footer
    %s13 = sadd.s32 1, %s9
  $region7: #{_lambda_.1} parent=0 // loop_footer_branch
    %8 = sbr.rel target = $region3
  $region8: #{_lambda_.1} parent=0 // loop_exit
    _

</llo_original>
